<compile_context>
chip_gen: v7x
topology: tpu7x:2x2x1
jax: 0.10.0
libtpu: 0.0.40
codegen_flags: <defaults>
</compile_context>

<pallas_src>
import functools
import math
from typing import NamedTuple, Optional, Tuple

import jax
import jax.numpy as jnp
from jax.experimental import pallas as pl
from jax.experimental.pallas import tpu as pltpu

_LANE = 128
_SUBLANE = 8


def _round_up(x: int, m: int) -> int:
    return ((x + m - 1) // m) * m


def _vmem_cap_bytes() -> int:
    """Generation-aware scoped-VMEM cap (~half of physical per TensorCore)."""
    try:
        cap = int(pltpu.get_tpu_info().vmem_capacity_bytes)
    except Exception:
        cap = 64 * 1024 * 1024          # conservative (v7x per-TC VMEM)
    return max(32 * 1024 * 1024, cap // 2)


def _act(y, name):
    if name == "relu":
        return jnp.maximum(y, 0.0)
    if name == "sigmoid":
        return jax.nn.sigmoid(y)
    if name == "tanh":
        return jnp.tanh(y)
    if name is None:
        return y
    raise ValueError("Invalid activation function")


# ============================================================================
# Fused DNN stack: one pallas_call, weights VMEM-resident, hidden acts in VMEM
# ============================================================================
class PackedDNN(NamedTuple):
    weights: Tuple[jax.Array, ...]    # (K_pad_i, N_pad_i)  transposed + padded
    biases: Tuple[jax.Array, ...]     # (1, N_pad_i)
    dims_out: Tuple[int, ...]         # true output widths
    dim_in: int
    activation: Optional[str]


def prepack_dnn(layers, activation="relu") -> PackedDNN:
    """layers: list of (weight (out,in), bias (out,) or None) PyTorch-layout."""
    ws, bs, douts = [], [], []
    k_pad = int(layers[0][0].shape[1])            # first layer K = dim_in (unpadded)
    dim_in = k_pad
    for (w, b) in layers:
        dout, din = w.shape
        assert din <= k_pad
        n_pad = _round_up(dout, _LANE)            # lane-dense output columns
        wt = jnp.transpose(w).astype(jnp.float32)
        wt = jnp.pad(wt, ((0, k_pad - din), (0, n_pad - dout)))
        bb = (b if b is not None else jnp.zeros((dout,), jnp.float32))
        bb = jnp.pad(bb.astype(jnp.float32), (0, n_pad - dout)).reshape(1, n_pad)
        ws.append(wt)
        bs.append(bb)
        douts.append(int(dout))
        k_pad = n_pad                              # next layer consumes padded width
    return PackedDNN(tuple(ws), tuple(bs), tuple(douts), dim_in, activation)


def _dnn_kernel(*refs, n_layers, activation):
    x_ref = refs[0]
    w_refs = refs[1:1 + n_layers]
    b_refs = refs[1 + n_layers:1 + 2 * n_layers]
    o_ref = refs[1 + 2 * n_layers]
    h = x_ref[...].astype(jnp.float32)
    for i in range(n_layers):
        h = jnp.dot(h, w_refs[i][...], preferred_element_type=jnp.float32)
        h = h + b_refs[i][...]
        if i != n_layers - 1:                      # last LinearACT has activation=None
            h = _act(h, activation)
    o_ref[...] = h.astype(o_ref.dtype)


def dnn_forward(x, packed: PackedDNN):
    B, dim_in = x.shape
    assert dim_in == packed.dim_in
    n_layers = len(packed.weights)
    n_last_pad = packed.weights[-1].shape[1]

    # Batch tile: aim for >=2 blocks so both TensorCores get work on dual-TC parts.
    b8 = _round_up(B, _SUBLANE)
    if b8 <= 128:
        tm = b8 if b8 <= _SUBLANE else _round_up((b8 + 1) // 2, _SUBLANE)
    else:
        tm = 128
    b_pad = _round_up(B, tm)
    nb = b_pad // tm
    x_p = jnp.pad(x, ((0, b_pad - B), (0, 0))) if b_pad != B else x

    x_spec = pl.BlockSpec((tm, dim_in), lambda i: (i, 0))
    w_specs = [pl.BlockSpec(w.shape, lambda i: (0, 0)) for w in packed.weights]
    b_specs = [pl.BlockSpec(b.shape, lambda i: (0, 0)) for b in packed.biases]
    o_spec = pl.BlockSpec((tm, n_last_pad), lambda i: (i, 0))

    # VMEM budget: double-buffered IO tiles + resident params + widest live
    # intermediate + slack (all f32).
    param_bytes = sum(int(w.size + b.size) * 4
                      for w, b in zip(packed.weights, packed.biases))
    widest = max([dim_in] + [int(w.shape[1]) for w in packed.weights])
    need = (2 * (tm * dim_in + tm * n_last_pad) * 4 + 2 * param_bytes
            + 2 * tm * widest * 4 + (4 << 20))
    vmem_limit = int(min(_vmem_cap_bytes(), max(need, 32 << 20)))

    flops, prev = 0, dim_in
    for dout in packed.dims_out:
        flops += 2 * B * prev * dout
        prev = dout
    bytes_accessed = int((x_p.size + sum(int(w.size) for w in packed.weights)
                          + sum(int(b.size) for b in packed.biases)
                          + b_pad * n_last_pad) * 4)
    cost = pl.CostEstimate(flops=int(flops), transcendentals=0,
                           bytes_accessed=bytes_accessed)

    kernel = functools.partial(_dnn_kernel, n_layers=n_layers,
                               activation=packed.activation)
    out = pl.pallas_call(
        kernel,
        out_shape=jax.ShapeDtypeStruct((b_pad, n_last_pad), x.dtype),
        grid_spec=pltpu.PrefetchScalarGridSpec(
            num_scalar_prefetch=0,
            grid=(nb,),
            in_specs=[x_spec] + w_specs + b_specs,
            out_specs=o_spec,
        ),
        compiler_params=pltpu.CompilerParams(
            dimension_semantics=("parallel",),
            vmem_limit_bytes=vmem_limit,
        ),
        cost_estimate=cost,
    )(x_p, *packed.weights, *packed.biases)
    return out[:B, :packed.dims_out[-1]]


# ============================================================================
# Fused CIN: outer product + 1x1 conv + ReLU + split_half + sum-over-emb
# pooling, all in VMEM, one pallas_call over batch tiles.
# ============================================================================
class PackedCIN(NamedTuple):
    weights: Tuple[jax.Array, ...]      # (O_i, num_fields * prev_i)
    biases: Tuple[jax.Array, ...]       # (O_i, 1)
    keep_channels: Tuple[int, ...]      # channels contributed to pooled f per layer
    split_half: bool
    num_fields: int


def prepack_cin(convs, num_fields, split_half=True) -> PackedCIN:
    """convs: list of (weight (out, num_fields*prev), bias (out,) or None)."""
    ws, bs, keep = [], [], []
    prev = num_fields
    L = len(convs)
    for i, (w, b) in enumerate(convs):
        O, K = w.shape
        assert K == num_fields * prev
        ws.append(w.astype(jnp.float32))
        bb = (b if b is not None else jnp.zeros((O,), jnp.float32))
        bs.append(bb.astype(jnp.float32).reshape(O, 1))
        out_ch = O // 2 if (split_half and i != L - 1) else O
        keep.append(int(out_ch))
        prev = out_ch
    return PackedCIN(tuple(ws), tuple(bs), tuple(keep), split_half, num_fields)


def _cin_kernel(*refs, n_layers, emb_dim, split_half, tb):
    x_ref = refs[0]                           # (num_fields, tb*emb_dim)
    w_refs = refs[1:1 + n_layers]
    b_refs = refs[1 + n_layers:1 + 2 * n_layers]
    o_ref = refs[1 + 2 * n_layers]            # (tb, fc_dim)

    d = emb_dim
    L = tb * d
    x0 = x_ref[...].astype(jnp.float32)       # (m, L) channel-major, lane-dense
    m = x0.shape[0]

    # Pooling matrix pool[b, j] = 1 iff lane j belongs to local batch b
    # (cmp-only construction; the pooling sum_d becomes one MXU matmul).
    bidx = jax.lax.broadcasted_iota(jnp.int32, (tb, L), 0)
    jidx = jax.lax.broadcasted_iota(jnp.int32, (tb, L), 1)
    pool = ((jidx >= bidx * d) & (jidx < (bidx + 1) * d)).astype(jnp.float32)

    h = x0
    off = 0
    for i in range(n_layers):
        n = h.shape[0]
        # Outer product, rows ordered m-major to match Conv1d's channel layout.
        t = jnp.concatenate([x0[j:j + 1, :] * h for j in range(m)], axis=0)  # (m*n, L)
        w = w_refs[i][...].astype(jnp.float32)                               # (O, m*n)
        z = jnp.dot(w, t, preferred_element_type=jnp.float32)                # (O, L)
        z = jnp.maximum(z + b_refs[i][...], 0.0)
        if split_half and i != n_layers - 1:
            half = z.shape[0] // 2
            xi, h = z[:half, :], z[half:, :]
        else:
            xi = h = z
        # pooled[b, o] = sum_d xi[o, b*d + d']  -> (tb, O)
        pooled = jax.lax.dot_general(
            pool, xi, dimension_numbers=(((1,), (1,)), ((), ())),
            preferred_element_type=jnp.float32)
        c = xi.shape[0]
        o_ref[:, off:off + c] = pooled.astype(o_ref.dtype)
        off += c


def cin_pooled_features(x, packed: PackedCIN):
    """x: (B, num_fields, emb_dim) -> pooled CIN features f: (B, fc_dim)."""
    B, m, d = x.shape
    assert m == packed.num_fields
    n_layers = len(packed.weights)
    fc_dim = sum(packed.keep_channels)

    # Largest per-layer VMEM intermediate row count (outer-product + conv out).
    max_rows, prev = 0, m
    for i, w in enumerate(packed.weights):
        max_rows = max(max_rows, m * prev + int(w.shape[0]))
        prev = packed.keep_channels[i]

    # Batch tile along the lane axis: tb*d must be a multiple of 128 (or the
    # whole batch in one full-extent block).  Bound the biggest intermediate.
    budget = 8 << 20
    valid = [t for t in (128, 64, 32, 16, 8) if (t * d) % _LANE == 0]
    if not valid:
        valid = [_LANE]                       # 128*d is always a multiple of 128
    fitting = [t for t in valid if max_rows * t * d * 4 <= budget]
    tb = max(fitting) if fitting else min(valid)
    if B <= tb:
        tb, b_pad = B, B                      # single full-extent block
    else:
        b_pad = _round_up(B, tb)
    nb = b_pad // tb

    # Layout change ONCE at CIN entry: (B, m, d) -> channel-major (m, B*d).
    x_cbd = jnp.transpose(x, (1, 0, 2)).reshape(m, B * d)
    if b_pad != B:
        x_cbd = jnp.pad(x_cbd, ((0, 0), (0, (b_pad - B) * d)))

    x_spec = pl.BlockSpec((m, tb * d), lambda i: (0, i))
    w_specs = [pl.BlockSpec(w.shape, lambda i: (0, 0)) for w in packed.weights]
    b_specs = [pl.BlockSpec(b.shape, lambda i: (0, 0)) for b in packed.biases]
    o_spec = pl.BlockSpec((tb, fc_dim), lambda i: (i, 0))

    param_bytes = sum(int(w.size + b.size) * 4
                      for w, b in zip(packed.weights, packed.biases))
    inter = (max_rows * tb * d + tb * tb * d) * 4      # t + z (+ pool matrix)
    need = (2 * (m * tb * d + tb * fc_dim) * 4 + 2 * param_bytes
            + 2 * inter + (4 << 20))
    vmem_limit = int(min(_vmem_cap_bytes(), max(need, 32 << 20)))

    flops = 0
    for i, w in enumerate(packed.weights):
        O, K = w.shape
        flops += B * d * K                    # outer product multiplies
        flops += 2 * B * d * K * O            # 1x1 conv matmul
        flops += 2 * B * d * packed.keep_channels[i]   # pooling
    bytes_accessed = int((x_cbd.size) * 4 + param_bytes + b_pad * fc_dim * 4)
    cost = pl.CostEstimate(flops=int(flops), transcendentals=0,
                           bytes_accessed=bytes_accessed)

    kernel = functools.partial(_cin_kernel, n_layers=n_layers, emb_dim=d,
                               split_half=packed.split_half, tb=tb)
    out = pl.pallas_call(
        kernel,
        out_shape=jax.ShapeDtypeStruct((b_pad, fc_dim), x.dtype),
        grid_spec=pltpu.PrefetchScalarGridSpec(
            num_scalar_prefetch=0,
            grid=(nb,),
            in_specs=[x_spec] + w_specs + b_specs,
            out_specs=o_spec,
        ),
        compiler_params=pltpu.CompilerParams(
            dimension_semantics=("parallel",),
            vmem_limit_bytes=vmem_limit,
        ),
        cost_estimate=cost,
    )(x_cbd, *packed.weights, *packed.biases)
    return out[:B]


# ============================================================================
# Tiny dim_out==1 heads stay in plain XLA (per perf review: a Pallas launch
# padded to 128 output lanes is >99% wasted work for a GEMV).
# ============================================================================
def _xla_head(x, w, b):
    y = jnp.dot(x, w.T, preferred_element_type=jnp.float32)
    if b is not None:
        y = y + b
    return y.astype(x.dtype)


def xdeepfm_forward(x, params):
    B = x.shape[0]
    x_flat = x.reshape(B, -1)
    x_linear = _xla_head(x_flat, *params["linear"])
    f = cin_pooled_features(x, params["cin"])          # fused Pallas CIN
    x_cin = _xla_head(f, *params["cin_fc"])
    x_deep = dnn_forward(x_flat, params["dnn"])        # fused Pallas DNN
    y = jnp.concatenate([x_linear, x_cin, x_deep], axis=1)
    y = _xla_head(y, *params["pred"])
    y = jax.nn.sigmoid(y)        # nn.Sigmoid inside self.pred
    return jax.nn.sigmoid(y)     # torch.sigmoid applied again by the module


# ============================================================================
# Pure-JAX reference (mirrors the PyTorch module, eval mode).
# ============================================================================
def _ref_linear(x, w, b, activation=None):
    y = x @ w.T
    if b is not None:
        y = y + b
    return _act(y, activation)


def ref_dnn(x, layers, activation="relu"):
    h = x
    n = len(layers)
    for i, (w, b) in enumerate(layers):
        h = _ref_linear(h, w, b, activation if i != n - 1 else None)
    return h


def ref_cin_pooled(x, convs, split_half=True):
    xs = []
    x0 = h = x
    L = len(convs)
    for i, (w, b) in enumerate(convs):
        z = jnp.einsum("bmd,bnd->bmnd", x0, h)
        Bz, m, n, d = z.shape
        z = z.reshape(Bz, m * n, d)
        z = jnp.einsum("ok,bkd->bod", w, z)
        if b is not None:
            z = z + b[None, :, None]
        z = jnp.maximum(z, 0.0)
        if split_half and i != L - 1:
            half = z.shape[1] // 2
            xi, h = z[:, :half, :], z[:, half:, :]
        else:
            xi = h = z
        xs.append(xi)
    return jnp.sum(jnp.concatenate(xs, axis=1), axis=2)


def ref_xdeepfm(x, raw, split_half=True):
    B = x.shape[0]
    x_flat = x.reshape(B, -1)
    x_linear = _ref_linear(x_flat, *raw["linear"])
    f = ref_cin_pooled(x, raw["cin_convs"], split_half=split_half)
    x_cin = _ref_linear(f, *raw["cin_fc"])
    x_deep = ref_dnn(x_flat, raw["dnn"])
    y = jnp.concatenate([x_linear, x_cin, x_deep], axis=1)
    y = _ref_linear(y, *raw["pred"])
    return jax.nn.sigmoid(jax.nn.sigmoid(y))


# ============================================================================
# Parameter construction (nn.Linear / nn.Conv1d(k=1)-style uniform init).
# ============================================================================
def init_linear(key, dim_in, dim_out, bias=True):
    kw, kb = jax.random.split(key)
    bound = 1.0 / math.sqrt(dim_in)
    w = jax.random.uniform(kw, (dim_out, dim_in), jnp.float32, -bound, bound)
    b = (jax.random.uniform(kb, (dim_out,), jnp.float32, -bound, bound)
         if bias else None)
    return w, b


def build_cin_raw(key, num_fields, dim_hiddens, split_half=True, bias=True):
    keys = jax.random.split(key, len(dim_hiddens))
    convs = []
    prev = num_fields
    L = len(dim_hiddens)
    for i, hdim in enumerate(dim_hiddens):
        convs.append(init_linear(keys[i], num_fields * prev, hdim, bias))
        out_ch = hdim // 2 if (split_half and i != L - 1) else hdim
        prev = out_ch
    return convs


if __name__ == "__main__":
    master = jax.random.PRNGKey(0)

    configs = [
        dict(batch=4, num_fields=6, emb_dim=8, dnn_hiddens=(32, 16),
             cin_hiddens=(8, 4), num_classes=1, split_half=True),
        # exercises grid > 1 (multiple batch tiles) and batch padding
        dict(batch=300, num_fields=6, emb_dim=8, dnn_hiddens=(64, 32, 16),
             cin_hiddens=(16, 8), num_classes=1, split_half=True),
    ]

    for ci, cfg in enumerate(configs):
        key = jax.random.fold_in(master, ci)
        kx, klin, kdnn, kcin, kfc, kpred = jax.random.split(key, 6)
        B, m, d = cfg["batch"], cfg["num_fields"], cfg["emb_dim"]
        nc = cfg["num_classes"]
        split_half = cfg["split_half"]
        x = jax.random.normal(kx, (B, m, d), jnp.float32)
        dim_flat = m * d

        raw = {}
        raw["linear"] = init_linear(klin, dim_flat, nc, True)
        dnn_keys = jax.random.split(kdnn, len(cfg["dnn_hiddens"]))
        raw["dnn"] = []
        prev = dim_flat
        for i, hdim in enumerate(cfg["dnn_hiddens"]):
            raw["dnn"].append(init_linear(dnn_keys[i], prev, hdim, True))
            prev = hdim
        raw["cin_convs"] = build_cin_raw(kcin, m, list(cfg["cin_hiddens"]),
                                         split_half, True)
        packed_cin = prepack_cin(raw["cin_convs"], m, split_half)
        fc_dim = sum(packed_cin.keep_channels)
        raw["cin_fc"] = init_linear(kfc, fc_dim, nc, True)
        pred_in = nc + cfg["dnn_hiddens"][-1] + nc
        raw["pred"] = init_linear(kpred, pred_in, nc, True)

        packed = {
            "linear": raw["linear"],
            "cin": packed_cin,
            "cin_fc": raw["cin_fc"],
            "dnn": prepack_dnn(raw["dnn"], activation="relu"),
            "pred": raw["pred"],
        }

        # --- granular kernel checks ---
        f_pal = jax.jit(lambda xx: cin_pooled_features(xx, packed["cin"]))(x)
        jax.block_until_ready(f_pal)
        f_ref = ref_cin_pooled(x, raw["cin_convs"], split_half=split_half)
        assert f_pal.shape == f_ref.shape
        assert jnp.allclose(f_pal, f_ref, atol=1e-4, rtol=1e-4), (
            f"CIN mismatch: {float(jnp.max(jnp.abs(f_pal - f_ref)))}")

        x_flat = x.reshape(B, -1)
        h_pal = jax.jit(lambda xx: dnn_forward(xx, packed["dnn"]))(x_flat)
        jax.block_until_ready(h_pal)
        h_ref = ref_dnn(x_flat, raw["dnn"])
        assert jnp.allclose(h_pal, h_ref, atol=1e-4, rtol=1e-4), (
            f"DNN mismatch: {float(jnp.max(jnp.abs(h_pal - h_ref)))}")

        # --- full model ---
        fwd = jax.jit(lambda xx: xdeepfm_forward(xx, packed))
        y = fwd(x)
        jax.block_until_ready(y)
        y_ref = ref_xdeepfm(x, raw, split_half=split_half)
        assert y.shape == (B, nc)
        assert jnp.allclose(y, y_ref, atol=1e-4, rtol=1e-4), (
            f"xDeepFM mismatch: {float(jnp.max(jnp.abs(y - y_ref)))}")

    print("KERNEL_OK")
</pallas_src>

<mosaic_0001>
module attributes {stable_mosaic.version = 11 : i64} {
  func.func @_cin_kernel(%arg0: i32, %arg1: memref<6x32xf32, #tpu.memory_space<vmem>>, %arg2: memref<8x36xf32, #tpu.memory_space<vmem>>, %arg3: memref<4x24xf32, #tpu.memory_space<vmem>>, %arg4: memref<8x1xf32, #tpu.memory_space<vmem>>, %arg5: memref<4x1xf32, #tpu.memory_space<vmem>>, %arg6: memref<4x8xf32, #tpu.memory_space<vmem>>) attributes {dimension_semantics = [#tpu.dimension_semantics<parallel>], iteration_bounds = array<i64: 1>, scalar_prefetch = 0 : i64, scratch_operands = 0 : i64, tpu.core_type = #tpu.core_type<tc>, window_params = [{transform_indices = @transform_0, window_bounds = array<i64: 6, 32>}, {pipeline_mode = #tpu.pipeline_mode<synchronous>, transform_indices = @transform_1, window_bounds = array<i64: 8, 36>}, {pipeline_mode = #tpu.pipeline_mode<synchronous>, transform_indices = @transform_2, window_bounds = array<i64: 4, 24>}, {pipeline_mode = #tpu.pipeline_mode<synchronous>, transform_indices = @transform_3, window_bounds = array<i64: 8, 1>}, {pipeline_mode = #tpu.pipeline_mode<synchronous>, transform_indices = @transform_4, window_bounds = array<i64: 4, 1>}, {transform_indices = @transform_5, window_bounds = array<i64: 4, 8>}]} {
    %c0 = arith.constant 0 : index
    %c0_0 = arith.constant 0 : index
    %0 = vector.load %arg1[%c0, %c0_0] : memref<6x32xf32, #tpu.memory_space<vmem>>, vector<6x32xf32>
    %1 = tpu.iota {dimensions = array<i32: 0>} : vector<4x32xi32>
    %2 = tpu.iota {dimensions = array<i32: 1>} : vector<4x32xi32>
    %c8_i32 = arith.constant 8 : i32
    %3 = vector.broadcast %c8_i32 : i32 to vector<4x32xi32>
    %4 = arith.muli %1, %3 : vector<4x32xi32>
    %5 = arith.cmpi sge, %2, %4 : vector<4x32xi32>
    %c1_i32 = arith.constant 1 : i32
    %6 = vector.broadcast %c1_i32 : i32 to vector<4x32xi32>
    %7 = arith.addi %1, %6 : vector<4x32xi32>
    %c8_i32_1 = arith.constant 8 : i32
    %8 = vector.broadcast %c8_i32_1 : i32 to vector<4x32xi32>
    %9 = arith.muli %7, %8 : vector<4x32xi32>
    %10 = arith.cmpi slt, %2, %9 : vector<4x32xi32>
    %11 = arith.andi %5, %10 : vector<4x32xi1>
    %12 = arith.extui %11 : vector<4x32xi1> to vector<4x32xi32>
    %13 = arith.sitofp %12 : vector<4x32xi32> to vector<4x32xf32>
    %14 = vector.extract_strided_slice %0 {offsets = [0, 0], sizes = [1, 32], strides = [1, 1]} : vector<6x32xf32> to vector<1x32xf32>
    %15 = vector.broadcast %14 : vector<1x32xf32> to vector<6x32xf32>
    %16 = arith.mulf %15, %0 : vector<6x32xf32>
    %17 = vector.extract_strided_slice %0 {offsets = [1, 0], sizes = [1, 32], strides = [1, 1]} : vector<6x32xf32> to vector<1x32xf32>
    %18 = vector.broadcast %17 : vector<1x32xf32> to vector<6x32xf32>
    %19 = arith.mulf %18, %0 : vector<6x32xf32>
    %20 = vector.extract_strided_slice %0 {offsets = [2, 0], sizes = [1, 32], strides = [1, 1]} : vector<6x32xf32> to vector<1x32xf32>
    %21 = vector.broadcast %20 : vector<1x32xf32> to vector<6x32xf32>
    %22 = arith.mulf %21, %0 : vector<6x32xf32>
    %23 = vector.extract_strided_slice %0 {offsets = [3, 0], sizes = [1, 32], strides = [1, 1]} : vector<6x32xf32> to vector<1x32xf32>
    %24 = vector.broadcast %23 : vector<1x32xf32> to vector<6x32xf32>
    %25 = arith.mulf %24, %0 : vector<6x32xf32>
    %26 = vector.extract_strided_slice %0 {offsets = [4, 0], sizes = [1, 32], strides = [1, 1]} : vector<6x32xf32> to vector<1x32xf32>
    %27 = vector.broadcast %26 : vector<1x32xf32> to vector<6x32xf32>
    %28 = arith.mulf %27, %0 : vector<6x32xf32>
    %29 = vector.extract_strided_slice %0 {offsets = [5, 0], sizes = [1, 32], strides = [1, 1]} : vector<6x32xf32> to vector<1x32xf32>
    %30 = vector.broadcast %29 : vector<1x32xf32> to vector<6x32xf32>
    %31 = arith.mulf %30, %0 : vector<6x32xf32>
    %32 = tpu.concatenate %16, %19, %22, %25, %28, %31 in 0 : vector<6x32xf32>, vector<6x32xf32>, vector<6x32xf32>, vector<6x32xf32>, vector<6x32xf32>, vector<6x32xf32> -> vector<36x32xf32>
    %c0_2 = arith.constant 0 : index
    %c0_3 = arith.constant 0 : index
    %33 = vector.load %arg2[%c0_2, %c0_3] : memref<8x36xf32, #tpu.memory_space<vmem>>, vector<8x36xf32>
    %cst = arith.constant dense<0.000000e+00> : vector<8x32xf32>
    %34 = tpu.matmul %33, %32, %cst {dimension_numbers = #tpu.dot_dimension_numbers<[1], [0], [0], [1], [0, 0, 1, 1], [], []>} : vector<8x36xf32>, vector<36x32xf32>, vector<8x32xf32> -> vector<8x32xf32>
    %c0_4 = arith.constant 0 : index
    %c0_5 = arith.constant 0 : index
    %35 = vector.load %arg4[%c0_4, %c0_5] : memref<8x1xf32, #tpu.memory_space<vmem>>, vector<8x1xf32>
    %36 = vector.broadcast %35 : vector<8x1xf32> to vector<8x32xf32>
    %37 = arith.addf %34, %36 : vector<8x32xf32>
    %cst_6 = arith.constant 0.000000e+00 : f32
    %38 = vector.broadcast %cst_6 : f32 to vector<8x32xf32>
    %39 = arith.maximumf %37, %38 : vector<8x32xf32>
    %40 = vector.extract_strided_slice %39 {offsets = [0, 0], sizes = [4, 32], strides = [1, 1]} : vector<8x32xf32> to vector<4x32xf32>
    %41 = vector.extract_strided_slice %39 {offsets = [4, 0], sizes = [4, 32], strides = [1, 1]} : vector<8x32xf32> to vector<4x32xf32>
    %cst_7 = arith.constant dense<0.000000e+00> : vector<4x4xf32>
    %42 = tpu.matmul %13, %40, %cst_7 {dimension_numbers = #tpu.dot_dimension_numbers<[1], [1], [0], [0], [0, 0, 1, 0], [], []>} : vector<4x32xf32>, vector<4x32xf32>, vector<4x4xf32> -> vector<4x4xf32>
    %c0_8 = arith.constant 0 : index
    %c0_9 = arith.constant 0 : index
    %43 = vector.load %arg6[%c0_8, %c0_9] : memref<4x8xf32, #tpu.memory_space<vmem>>, vector<4x4xf32>
    tpu.vector_store %arg6[%c0_8, %c0_9], %42 {strides = array<i32>} : memref<4x8xf32, #tpu.memory_space<vmem>>, vector<4x4xf32>,
    %44 = vector.extract_strided_slice %0 {offsets = [0, 0], sizes = [1, 32], strides = [1, 1]} : vector<6x32xf32> to vector<1x32xf32>
    %45 = vector.broadcast %44 : vector<1x32xf32> to vector<4x32xf32>
    %46 = arith.mulf %45, %41 : vector<4x32xf32>
    %47 = vector.extract_strided_slice %0 {offsets = [1, 0], sizes = [1, 32], strides = [1, 1]} : vector<6x32xf32> to vector<1x32xf32>
    %48 = vector.broadcast %47 : vector<1x32xf32> to vector<4x32xf32>
    %49 = arith.mulf %48, %41 : vector<4x32xf32>
    %50 = vector.extract_strided_slice %0 {offsets = [2, 0], sizes = [1, 32], strides = [1, 1]} : vector<6x32xf32> to vector<1x32xf32>
    %51 = vector.broadcast %50 : vector<1x32xf32> to vector<4x32xf32>
    %52 = arith.mulf %51, %41 : vector<4x32xf32>
    %53 = vector.extract_strided_slice %0 {offsets = [3, 0], sizes = [1, 32], strides = [1, 1]} : vector<6x32xf32> to vector<1x32xf32>
    %54 = vector.broadcast %53 : vector<1x32xf32> to vector<4x32xf32>
    %55 = arith.mulf %54, %41 : vector<4x32xf32>
    %56 = vector.extract_strided_slice %0 {offsets = [4, 0], sizes = [1, 32], strides = [1, 1]} : vector<6x32xf32> to vector<1x32xf32>
    %57 = vector.broadcast %56 : vector<1x32xf32> to vector<4x32xf32>
    %58 = arith.mulf %57, %41 : vector<4x32xf32>
    %59 = vector.extract_strided_slice %0 {offsets = [5, 0], sizes = [1, 32], strides = [1, 1]} : vector<6x32xf32> to vector<1x32xf32>
    %60 = vector.broadcast %59 : vector<1x32xf32> to vector<4x32xf32>
    %61 = arith.mulf %60, %41 : vector<4x32xf32>
    %62 = tpu.concatenate %46, %49, %52, %55, %58, %61 in 0 : vector<4x32xf32>, vector<4x32xf32>, vector<4x32xf32>, vector<4x32xf32>, vector<4x32xf32>, vector<4x32xf32> -> vector<24x32xf32>
    %c0_10 = arith.constant 0 : index
    %c0_11 = arith.constant 0 : index
    %63 = vector.load %arg3[%c0_10, %c0_11] : memref<4x24xf32, #tpu.memory_space<vmem>>, vector<4x24xf32>
    %cst_12 = arith.constant dense<0.000000e+00> : vector<4x32xf32>
    %64 = tpu.matmul %63, %62, %cst_12 {dimension_numbers = #tpu.dot_dimension_numbers<[1], [0], [0], [1], [0, 0, 1, 1], [], []>} : vector<4x24xf32>, vector<24x32xf32>, vector<4x32xf32> -> vector<4x32xf32>
    %c0_13 = arith.constant 0 : index
    %c0_14 = arith.constant 0 : index
    %65 = vector.load %arg5[%c0_13, %c0_14] : memref<4x1xf32, #tpu.memory_space<vmem>>, vector<4x1xf32>
    %66 = vector.broadcast %65 : vector<4x1xf32> to vector<4x32xf32>
    %67 = arith.addf %64, %66 : vector<4x32xf32>
    %cst_15 = arith.constant 0.000000e+00 : f32
    %68 = vector.broadcast %cst_15 : f32 to vector<4x32xf32>
    %69 = arith.maximumf %67, %68 : vector<4x32xf32>
    %cst_16 = arith.constant dense<0.000000e+00> : vector<4x4xf32>
    %70 = tpu.matmul %13, %69, %cst_16 {dimension_numbers = #tpu.dot_dimension_numbers<[1], [1], [0], [0], [0, 0, 1, 0], [], []>} : vector<4x32xf32>, vector<4x32xf32>, vector<4x4xf32> -> vector<4x4xf32>
    %c0_17 = arith.constant 0 : index
    %c4 = arith.constant 4 : index
    %71 = vector.load %arg6[%c0_17, %c4] : memref<4x8xf32, #tpu.memory_space<vmem>>, vector<4x4xf32>
    tpu.vector_store %arg6[%c0_17, %c4], %70 {strides = array<i32>} : memref<4x8xf32, #tpu.memory_space<vmem>>, vector<4x4xf32>,
    return
  }
  func.func @transform_0(%arg0: i32) -> (i32, i32) {
    %c0_i32 = arith.constant 0 : i32
    %c0_i32_0 = arith.constant 0 : i32
    return %c0_i32, %arg0 : i32, i32
  }
  func.func @transform_1(%arg0: i32) -> (i32, i32) {
    %c0_i32 = arith.constant 0 : i32
    %c0_i32_0 = arith.constant 0 : i32
    %c0_i32_1 = arith.constant 0 : i32
    return %c0_i32, %c0_i32_0 : i32, i32
  }
  func.func @transform_2(%arg0: i32) -> (i32, i32) {
    %c0_i32 = arith.constant 0 : i32
    %c0_i32_0 = arith.constant 0 : i32
    %c0_i32_1 = arith.constant 0 : i32
    return %c0_i32, %c0_i32_0 : i32, i32
  }
  func.func @transform_3(%arg0: i32) -> (i32, i32) {
    %c0_i32 = arith.constant 0 : i32
    %c0_i32_0 = arith.constant 0 : i32
    %c0_i32_1 = arith.constant 0 : i32
    return %c0_i32, %c0_i32_0 : i32, i32
  }
  func.func @transform_4(%arg0: i32) -> (i32, i32) {
    %c0_i32 = arith.constant 0 : i32
    %c0_i32_0 = arith.constant 0 : i32
    %c0_i32_1 = arith.constant 0 : i32
    return %c0_i32, %c0_i32_0 : i32, i32
  }
  func.func @transform_5(%arg0: i32) -> (i32, i32) {
    %c0_i32 = arith.constant 0 : i32
    %c0_i32_0 = arith.constant 0 : i32
    return %arg0, %c0_i32 : i32, i32
  }
}

</mosaic_0001>

<llo_original>
// kernel: _lambda_.1
$region0: #{_lambda_.1}
  #allocation0 [shape = 'u32[]', space=smem, size = 0x4, offset = 0x4, fixed_abs, tag = 'smem constant byte address 0x4 - core index']
  #allocation1 [shape = 'u32[144,128]{1,0:T(1,128)}', space=vmem, size = 0x12000, scoped, tag = 'internal scratch']
  %s0 = inlined_call_operand.vmem [shape: f32[6,32], index: 0, kind: input, shape index: {}]
  %s1 = inlined_call_operand.vmem [shape: f32[8,36], index: 1, kind: input, shape index: {}]
  %s2 = inlined_call_operand.vmem [shape: f32[4,24], index: 2, kind: input, shape index: {}]
  %s3 = inlined_call_operand.vmem [shape: f32[8,1], index: 3, kind: input, shape index: {}]
  %s4 = inlined_call_operand.vmem [shape: f32[4,1], index: 4, kind: input, shape index: {}]
  %s5 = inlined_call_operand.hbm [shape: f32[4,8], index: 5, kind: output, shape index: {}]
  %s6 = sld [smem:[#allocation0]]
  $region30: #{_lambda_.1} parent=0
    _
  %s8 = ssub.s32 1, %s6
  %s9 = scalar_select 0, %s8, %s6
  $region1: #{_lambda_.1} parent=0
    #allocation2 [shape = 'u8[2048]{0}', space=vmem, size = 0x800, scoped, tag = 'output window, operand 0, single buffered']
    #allocation3 [shape = 's32[1]{0}', space=sflag, size = 0x4, scoped, tag = 'scoped memory for _lambda_.1']
    %10 = vsyncpa [#allocation3], 0
    // Predicated region
    $region2: #{_lambda_.1} parent=1 // pred_check
      _
    $region3: #{_lambda_.1} parent=1 // pred_check_branch
      %12 = sbr.rel (0) target = $region5
    $region4: #{_lambda_.1} parent=1 // pred_region
      _
    $region5: #{_lambda_.1} parent=1 // pred_fallthru
      _
    // Predicated region
    $region6: #{_lambda_.1} parent=1 // pred_check
      _
    $region7: #{_lambda_.1} parent=1 // pred_check_branch
      %14 = sbr.rel (0) target = $region9
    $region8: #{_lambda_.1} parent=1 // pred_region
      _
    $region9: #{_lambda_.1} parent=1 // pred_fallthru
      _
    // Predicated region
    $region10: #{_lambda_.1} parent=1 // pred_check
      _
    $region11: #{_lambda_.1} parent=1 // pred_check_branch
      %16 = sbr.rel (0) target = $region13
    $region12: #{_lambda_.1} parent=1 // pred_region
      _
    $region13: #{_lambda_.1} parent=1 // pred_fallthru
      _
    // Predicated region
    $region14: #{_lambda_.1} parent=1 // pred_check
      _
    $region15: #{_lambda_.1} parent=1 // pred_check_branch
      %18 = sbr.rel (0) target = $region17
    $region16: #{_lambda_.1} parent=1 // pred_region
      _
    $region17: #{_lambda_.1} parent=1 // pred_fallthru
      _
    // Predicated region
    $region18: #{_lambda_.1} parent=1 // pred_check
      _
    $region19: #{_lambda_.1} parent=1 // pred_check_branch
      %20 = sbr.rel (0) target = $region21
    $region20: #{_lambda_.1} parent=1 // pred_region
      _
    $region21: #{_lambda_.1} parent=1 // pred_fallthru
      _
    %v21 = vld [vmem:[%s0] sm:$0x3f]
    %v22 = vlaneseq
    %v23 = vshrl.u32 %v22, 7
    %v24 = vlaneseq
    %v25 = vand.u32 %v24, 127
    %v26 = vmul.u32 %v23, 8
    %vm27 = vcmp.ge.s32.totalorder %v25, %v26
    %v28 = vadd.s32 %v23, 1
    %v29 = vmul.u32 %v28, 8
    %vm30 = vcmp.lt.s32.totalorder %v25, %v29
    %vm31 = vmand %vm27, %vm30
    %v32 = vsel %vm31, 1, 0
    %v33 = vcvt.s32.f32 %v32
    %v34 = vlaneseq
    %v35 = vshrl.u32 %v34, 7
    %v36 = vsub.s32 0, %v35
    %v37 = vrot.slane %v21, %v36
    %v38 = vmul.f32 %v37, %v21
    %v39 = vlaneseq
    %v40 = vshrl.u32 %v39, 7
    %v41 = vsub.s32 1, %v40
    %v42 = vrot.slane %v21, %v41
    %v43 = vmul.f32 %v42, %v21
    %v44 = vlaneseq
    %v45 = vshrl.u32 %v44, 7
    %v46 = vsub.s32 2, %v45
    %v47 = vrot.slane %v21, %v46
    %v48 = vmul.f32 %v47, %v21
    %v49 = vlaneseq
    %v50 = vshrl.u32 %v49, 7
    %v51 = vsub.s32 3, %v50
    %v52 = vrot.slane %v21, %v51
    %v53 = vmul.f32 %v52, %v21
    %v54 = vlaneseq
    %v55 = vshrl.u32 %v54, 7
    %v56 = vsub.s32 4, %v55
    %v57 = vrot.slane %v21, %v56
    %v58 = vmul.f32 %v57, %v21
    %v59 = vlaneseq
    %v60 = vshrl.u32 %v59, 7
    %v61 = vsub.s32 5, %v60
    %v62 = vrot.slane %v21, %v61
    %v63 = vmul.f32 %v62, %v21
    %v65 = vrot.slane %v43, 2
    %v68 = vrot.slane %v48, 4
    %v71 = vrot.slane %v53, 6
    %v74 = vrot.slane %v63, 2
    %vm76 = vcmask 1045504
    %v77 = vsel %vm76, %v38, %v65
    %vm78 = vcmask 1043456
    %v79 = vsel %vm78, %v65, %v68
    %vm80 = vcmask 1041408
    %v81 = vsel %vm80, %v68, %v71
    %v82 = vsel %vm76, %v58, %v74
    %v83 = vld [vmem:[%s1] sm:$0xff]
    %v84 = vld [vmem:[%s3] sm:$0xff]
    %86 = vset.pattern.permute.xlu0 0
    %87 = vperm.xlu0 %86, %v84
    %v88 = vpop.permute.xlu0 %87
    %vm90 = vcmask 293888
    %v92 = vsel %vm90, %v83, 0
    %v94 = vsel %vm78, %v74, 0
    %96 = vmatprep.subr.mxu0 0.0
    %97 = vmatpush1.msra.mxu0 %v77
    %98 = vmatprep.subr.mxu0 0.0
    %99 = vmatpush1.msra.mxu0 %v79
    %100 = vmatprep.subr.mxu0 0.0
    %101 = vmatpush1.msra.mxu0 %v81
    %102 = vmatprep.subr.mxu0 0.0
    %103 = vmatpush1.msra.mxu0 %v82
    %104 = vmatprep.subr.mxu0 0.0
    %105 = vmatpush1.msra.mxu0 %v94
    %106 = vmatprep.subr.mxu0 0.0
    %107 = vmatpush1.msra.mxu0 0.0
    %108 = vmatprep.subr.mxu0 0.0
    %109 = vmatpush1.msra.mxu0 0.0
    %110 = vmatprep.subr.mxu0 0.0
    %111 = vmatpush1.msra.mxu0 0.0
    %112 = vmatprep.subr.mxu0 0.0
    %113 = vmatpush1.msra.mxu0 0.0
    %114 = vmatprep.subr.mxu0 0.0
    %115 = vmatpush1.msra.mxu0 0.0
    %116 = vmatprep.subr.mxu0 0.0
    %117 = vmatpush1.msra.mxu0 0.0
    %118 = vmatprep.subr.mxu0 0.0
    %119 = vmatpush1.msra.mxu0 0.0
    %120 = vmatprep.subr.mxu0 0.0
    %121 = vmatpush1.msra.mxu0 0.0
    %122 = vmatprep.subr.mxu0 0.0
    %123 = vmatpush1.msra.mxu0 0.0
    %124 = vmatprep.subr.mxu0 0.0
    %125 = vmatpush1.msra.mxu0 0.0
    %126 = vmatprep.subr.mxu0 0.0
    %127 = vmatpush1.msra.mxu0 0.0
    %128 = vmatprep.subr.mxu0 0.0
    %129 = vmatpush1.msra.mxu0 0.0
    %130 = vmatprep.subr.mxu0 0.0
    %131 = vmatpush1.msra.mxu0 0.0
    %132 = vmatprep.subr.mxu0 0.0
    %133 = vmatpush1.msra.mxu0 0.0
    %134 = vmatprep.subr.mxu0 0.0
    %135 = vmatpush1.msra.mxu0 0.0
    %136 = vmatprep.subr.mxu0 0.0
    %137 = vmatpush1.msra.mxu0 0.0
    %138 = vmatprep.subr.mxu0 0.0
    %139 = vmatpush1.msra.mxu0 0.0
    %140 = vmatprep.subr.mxu0 0.0
    %141 = vmatpush1.msra.mxu0 0.0
    %142 = vmatprep.subr.mxu0 0.0
    %143 = vmatpush1.msra.mxu0 0.0
    %144 = vmatprep.subr.mxu0 0.0
    %145 = vmatpush1.msra.mxu0 0.0
    %146 = vmatprep.subr.mxu0 0.0
    %147 = vmatpush1.msra.mxu0 0.0
    %148 = vmatprep.subr.mxu0 0.0
    %149 = vmatpush1.msra.mxu0 0.0
    %150 = vmatprep.subr.mxu0 0.0
    %151 = vmatpush1.msra.mxu0 0.0
    %152 = vmatprep.subr.mxu0 0.0
    %153 = vmatpush1.msra.mxu0 0.0
    %154 = vmatprep.subr.mxu0 0.0
    %155 = vmatpush1.msra.mxu0 0.0
    %156 = vmatprep.subr.mxu0 0.0
    %157 = vmatpush1.msra.mxu0 0.0
    %158 = vmatprep.subr.mxu0 0.0
    %159 = vmatpush1.msra.mxu0 0.0
    %160 = vmatprep.mubr.f32.mxu0 0.0
    %161 = vmatmul.mubr.f32.gmra.mrb[0].mxu0 %v92
    %v162 = vpop.f32.mrb[0].mxu0
    %v163 = vadd.f32 %v88, %v162
    %v164 = vpop.f32.mrb[0].mxu0
    %165 = vdwg.mxu0
    %v166 = vmax.f32 %v163, 0.0
    %vm167 = vcmask 261120
    %v169 = vsel %vm167, %v33, 0
    %v172 = vsel %vm167, %v166, 0
    %174 = vmatprep.subr.mxu0 0.0
    %175 = vmatpush1.xpose.msra.mxu0 %v172
    %176 = vmatprep.subr.mxu0 0.0
    %177 = vmatpush1.xpose.msra.mxu0 0.0
    %178 = vmatprep.subr.mxu0 0.0
    %179 = vmatpush1.xpose.msra.mxu0 0.0
    %180 = vmatprep.subr.mxu0 0.0
    %181 = vmatpush1.xpose.msra.mxu0 0.0
    %182 = vmatprep.subr.mxu0 0.0
    %183 = vmatpush1.xpose.msra.mxu0 0.0
    %184 = vmatprep.subr.mxu0 0.0
    %185 = vmatpush1.xpose.msra.mxu0 0.0
    %186 = vmatprep.subr.mxu0 0.0
    %187 = vmatpush1.xpose.msra.mxu0 0.0
    %188 = vmatprep.subr.mxu0 0.0
    %189 = vmatpush1.xpose.msra.mxu0 0.0
    %190 = vmatprep.subr.mxu0 0.0
    %191 = vmatpush1.xpose.msra.mxu0 0.0
    %192 = vmatprep.subr.mxu0 0.0
    %193 = vmatpush1.xpose.msra.mxu0 0.0
    %194 = vmatprep.subr.mxu0 0.0
    %195 = vmatpush1.xpose.msra.mxu0 0.0
    %196 = vmatprep.subr.mxu0 0.0
    %197 = vmatpush1.xpose.msra.mxu0 0.0
    %198 = vmatprep.subr.mxu0 0.0
    %199 = vmatpush1.xpose.msra.mxu0 0.0
    %200 = vmatprep.subr.mxu0 0.0
    %201 = vmatpush1.xpose.msra.mxu0 0.0
    %202 = vmatprep.subr.mxu0 0.0
    %203 = vmatpush1.xpose.msra.mxu0 0.0
    %204 = vmatprep.subr.mxu0 0.0
    %205 = vmatpush1.xpose.msra.mxu0 0.0
    %206 = vmatprep.subr.mxu0 0.0
    %207 = vmatpush1.xpose.msra.mxu0 0.0
    %208 = vmatprep.subr.mxu0 0.0
    %209 = vmatpush1.xpose.msra.mxu0 0.0
    %210 = vmatprep.subr.mxu0 0.0
    %211 = vmatpush1.xpose.msra.mxu0 0.0
    %212 = vmatprep.subr.mxu0 0.0
    %213 = vmatpush1.xpose.msra.mxu0 0.0
    %214 = vmatprep.subr.mxu0 0.0
    %215 = vmatpush1.xpose.msra.mxu0 0.0
    %216 = vmatprep.subr.mxu0 0.0
    %217 = vmatpush1.xpose.msra.mxu0 0.0
    %218 = vmatprep.subr.mxu0 0.0
    %219 = vmatpush1.xpose.msra.mxu0 0.0
    %220 = vmatprep.subr.mxu0 0.0
    %221 = vmatpush1.xpose.msra.mxu0 0.0
    %222 = vmatprep.subr.mxu0 0.0
    %223 = vmatpush1.xpose.msra.mxu0 0.0
    %224 = vmatprep.subr.mxu0 0.0
    %225 = vmatpush1.xpose.msra.mxu0 0.0
    %226 = vmatprep.subr.mxu0 0.0
    %227 = vmatpush1.xpose.msra.mxu0 0.0
    %228 = vmatprep.subr.mxu0 0.0
    %229 = vmatpush1.xpose.msra.mxu0 0.0
    %230 = vmatprep.subr.mxu0 0.0
    %231 = vmatpush1.xpose.msra.mxu0 0.0
    %232 = vmatprep.subr.mxu0 0.0
    %233 = vmatpush1.xpose.msra.mxu0 0.0
    %234 = vmatprep.subr.mxu0 0.0
    %235 = vmatpush1.xpose.msra.mxu0 0.0
    %236 = vmatprep.subr.mxu0 0.0
    %237 = vmatpush1.xpose.msra.mxu0 0.0
    %238 = vmatprep.mubr.f32.mxu0 0.0
    %239 = vmatmul.mubr.f32.gmra.mrb[0].mxu0 %v169
    %v240 = vpop.f32.mrb[0].mxu0
    %v241 = vadd.f32 0.0, %v240
    %v242 = vpop.f32.mrb[0].mxu0
    %243 = vdwg.mxu0
    %vm244 = vcmask 27648
    %245 = vst.msk [vmem:[#allocation2] sm:$0xf] %vm244, %v241
    %v246 = vmul.f32 %v37, %v166
    %v247 = vmul.f32 %v42, %v166
    %v248 = vmul.f32 %v47, %v166
    %v249 = vmul.f32 %v52, %v166
    %v250 = vmul.f32 %v57, %v166
    %v251 = vmul.f32 %v62, %v166
    %v253 = vrot.slane %v246, 4
    %v256 = vrot.slane %v248, 4
    %v259 = vrot.slane %v250, 4
    %v261 = vsel %vm78, %v253, %v247
    %v262 = vsel %vm78, %v256, %v249
    %v263 = vsel %vm78, %v259, %v251
    %v264 = vld [vmem:[%s2] sm:$0xf]
    %v265 = vld [vmem:[%s4] sm:$0xf]
    %267 = vset.pattern.permute.xlu0 0
    %268 = vperm.xlu0 %267, %v265
    %v269 = vpop.permute.xlu0 %268
    %vm271 = vcmask 195584
    %v273 = vsel %vm271, %v264, 0
    %275 = vmatprep.subr.mxu0 0.0
    %276 = vmatpush1.msra.mxu0 %v261
    %277 = vmatprep.subr.mxu0 0.0
    %278 = vmatpush1.msra.mxu0 %v262
    %279 = vmatprep.subr.mxu0 0.0
    %280 = vmatpush1.msra.mxu0 %v263
    %281 = vmatprep.subr.mxu0 0.0
    %282 = vmatpush1.msra.mxu0 0.0
    %283 = vmatprep.subr.mxu0 0.0
    %284 = vmatpush1.msra.mxu0 0.0
    %285 = vmatprep.subr.mxu0 0.0
    %286 = vmatpush1.msra.mxu0 0.0
    %287 = vmatprep.subr.mxu0 0.0
    %288 = vmatpush1.msra.mxu0 0.0
    %289 = vmatprep.subr.mxu0 0.0
    %290 = vmatpush1.msra.mxu0 0.0
    %291 = vmatprep.subr.mxu0 0.0
    %292 = vmatpush1.msra.mxu0 0.0
    %293 = vmatprep.subr.mxu0 0.0
    %294 = vmatpush1.msra.mxu0 0.0
    %295 = vmatprep.subr.mxu0 0.0
    %296 = vmatpush1.msra.mxu0 0.0
    %297 = vmatprep.subr.mxu0 0.0
    %298 = vmatpush1.msra.mxu0 0.0
    %299 = vmatprep.subr.mxu0 0.0
    %300 = vmatpush1.msra.mxu0 0.0
    %301 = vmatprep.subr.mxu0 0.0
    %302 = vmatpush1.msra.mxu0 0.0
    %303 = vmatprep.subr.mxu0 0.0
    %304 = vmatpush1.msra.mxu0 0.0
    %305 = vmatprep.subr.mxu0 0.0
    %306 = vmatpush1.msra.mxu0 0.0
    %307 = vmatprep.subr.mxu0 0.0
    %308 = vmatpush1.msra.mxu0 0.0
    %309 = vmatprep.subr.mxu0 0.0
    %310 = vmatpush1.msra.mxu0 0.0
    %311 = vmatprep.subr.mxu0 0.0
    %312 = vmatpush1.msra.mxu0 0.0
    %313 = vmatprep.subr.mxu0 0.0
    %314 = vmatpush1.msra.mxu0 0.0
    %315 = vmatprep.subr.mxu0 0.0
    %316 = vmatpush1.msra.mxu0 0.0
    %317 = vmatprep.subr.mxu0 0.0
    %318 = vmatpush1.msra.mxu0 0.0
    %319 = vmatprep.subr.mxu0 0.0
    %320 = vmatpush1.msra.mxu0 0.0
    %321 = vmatprep.subr.mxu0 0.0
    %322 = vmatpush1.msra.mxu0 0.0
    %323 = vmatprep.subr.mxu0 0.0
    %324 = vmatpush1.msra.mxu0 0.0
    %325 = vmatprep.subr.mxu0 0.0
    %326 = vmatpush1.msra.mxu0 0.0
    %327 = vmatprep.subr.mxu0 0.0
    %328 = vmatpush1.msra.mxu0 0.0
    %329 = vmatprep.subr.mxu0 0.0
    %330 = vmatpush1.msra.mxu0 0.0
    %331 = vmatprep.subr.mxu0 0.0
    %332 = vmatpush1.msra.mxu0 0.0
    %333 = vmatprep.subr.mxu0 0.0
    %334 = vmatpush1.msra.mxu0 0.0
    %335 = vmatprep.subr.mxu0 0.0
    %336 = vmatpush1.msra.mxu0 0.0
    %337 = vmatprep.subr.mxu0 0.0
    %338 = vmatpush1.msra.mxu0 0.0
    %339 = vmatprep.mubr.f32.mxu0 0.0
    %340 = vmatmul.mubr.f32.gmra.mrb[0].mxu0 %v273
    %v341 = vpop.f32.mrb[0].mxu0
    %v342 = vadd.f32 %v269, %v341
    %v343 = vpop.f32.mrb[0].mxu0
    %344 = vdwg.mxu0
    %v345 = vmax.f32 %v342, 0.0
    %v347 = vsel %vm167, %v345, 0
    %349 = vmatprep.subr.mxu0 0.0
    %350 = vmatpush1.xpose.msra.mxu0 %v347
    %351 = vmatprep.subr.mxu0 0.0
    %352 = vmatpush1.xpose.msra.mxu0 0.0
    %353 = vmatprep.subr.mxu0 0.0
    %354 = vmatpush1.xpose.msra.mxu0 0.0
    %355 = vmatprep.subr.mxu0 0.0
    %356 = vmatpush1.xpose.msra.mxu0 0.0
    %357 = vmatprep.subr.mxu0 0.0
    %358 = vmatpush1.xpose.msra.mxu0 0.0
    %359 = vmatprep.subr.mxu0 0.0
    %360 = vmatpush1.xpose.msra.mxu0 0.0
    %361 = vmatprep.subr.mxu0 0.0
    %362 = vmatpush1.xpose.msra.mxu0 0.0
    %363 = vmatprep.subr.mxu0 0.0
    %364 = vmatpush1.xpose.msra.mxu0 0.0
    %365 = vmatprep.subr.mxu0 0.0
    %366 = vmatpush1.xpose.msra.mxu0 0.0
    %367 = vmatprep.subr.mxu0 0.0
    %368 = vmatpush1.xpose.msra.mxu0 0.0
    %369 = vmatprep.subr.mxu0 0.0
    %370 = vmatpush1.xpose.msra.mxu0 0.0
    %371 = vmatprep.subr.mxu0 0.0
    %372 = vmatpush1.xpose.msra.mxu0 0.0
    %373 = vmatprep.subr.mxu0 0.0
    %374 = vmatpush1.xpose.msra.mxu0 0.0
    %375 = vmatprep.subr.mxu0 0.0
    %376 = vmatpush1.xpose.msra.mxu0 0.0
    %377 = vmatprep.subr.mxu0 0.0
    %378 = vmatpush1.xpose.msra.mxu0 0.0
    %379 = vmatprep.subr.mxu0 0.0
    %380 = vmatpush1.xpose.msra.mxu0 0.0
    %381 = vmatprep.subr.mxu0 0.0
    %382 = vmatpush1.xpose.msra.mxu0 0.0
    %383 = vmatprep.subr.mxu0 0.0
    %384 = vmatpush1.xpose.msra.mxu0 0.0
    %385 = vmatprep.subr.mxu0 0.0
    %386 = vmatpush1.xpose.msra.mxu0 0.0
    %387 = vmatprep.subr.mxu0 0.0
    %388 = vmatpush1.xpose.msra.mxu0 0.0
    %389 = vmatprep.subr.mxu0 0.0
    %390 = vmatpush1.xpose.msra.mxu0 0.0
    %391 = vmatprep.subr.mxu0 0.0
    %392 = vmatpush1.xpose.msra.mxu0 0.0
    %393 = vmatprep.subr.mxu0 0.0
    %394 = vmatpush1.xpose.msra.mxu0 0.0
    %395 = vmatprep.subr.mxu0 0.0
    %396 = vmatpush1.xpose.msra.mxu0 0.0
    %397 = vmatprep.subr.mxu0 0.0
    %398 = vmatpush1.xpose.msra.mxu0 0.0
    %399 = vmatprep.subr.mxu0 0.0
    %400 = vmatpush1.xpose.msra.mxu0 0.0
    %401 = vmatprep.subr.mxu0 0.0
    %402 = vmatpush1.xpose.msra.mxu0 0.0
    %403 = vmatprep.subr.mxu0 0.0
    %404 = vmatpush1.xpose.msra.mxu0 0.0
    %405 = vmatprep.subr.mxu0 0.0
    %406 = vmatpush1.xpose.msra.mxu0 0.0
    %407 = vmatprep.subr.mxu0 0.0
    %408 = vmatpush1.xpose.msra.mxu0 0.0
    %409 = vmatprep.subr.mxu0 0.0
    %410 = vmatpush1.xpose.msra.mxu0 0.0
    %411 = vmatprep.subr.mxu0 0.0
    %412 = vmatpush1.xpose.msra.mxu0 0.0
    %413 = vmatprep.mubr.f32.mxu0 0.0
    %414 = vmatmul.mubr.f32.gmra.mrb[0].mxu0 %v169
    %v415 = vpop.f32.mrb[0].mxu0
    %v416 = vadd.f32 0.0, %v415
    %v417 = vpop.f32.mrb[0].mxu0
    %418 = vdwg.mxu0
    %420 = vrot.lane.b32.xlu0 %v416, 4
    %v421 = vpop.permute.xlu0 %420
    %vm423 = vcmask 60448
    %424 = vst.msk [vmem:[#allocation2] sm:$0xf] %vm423, %v421
    // Predicated region
    $region22: #{_lambda_.1} parent=1 // pred_check
      _
    $region23: #{_lambda_.1} parent=1 // pred_check_branch
      %426 = sbr.rel (0) target = $region25
    $region24: #{_lambda_.1} parent=1 // pred_region
      %s428 = ssub.s32 64, 64
      %429 = vsyncadd [#allocation3], %s428
      %s431 = sshll.u32 [#allocation2], 4
      %s432 = int_to_ptr.vmem [resolvable:$true] %s431
      %434 = dma.vmem_to_hbm [thread:$0]  %s432, 64, %s5, [#allocation3]
    $region25: #{_lambda_.1} parent=1 // pred_fallthru
      _
    // Predicated region
    $region26: #{_lambda_.1} parent=1 // pred_check
      _
    $region27: #{_lambda_.1} parent=1 // pred_check_branch
      %436 = sbr.rel (0) target = $region29
    $region28: #{_lambda_.1} parent=1 // pred_region
      %437 = dma.done [#allocation3], 64
    $region29: #{_lambda_.1} parent=1 // pred_fallthru
      _
    %438 = vsyncpa [#allocation3], 1

</llo_original>
